<compile_context>
chip_gen: v7x
topology: tpu7x:2x2x1
jax: 0.10.0
libtpu: 0.0.40
codegen_flags: <defaults>
</compile_context>

<pallas_src>
import jax
import jax.numpy as jnp
from jax.experimental import pallas as pl
from jax.experimental.pallas import tpu as pltpu

_LANES = 128
_MAX_TILE_ROWS = 1024  # (1024, 128) f32 = 512 KiB per stream per buffer


def _net_y_kernel(params_ref, x1_ref, x2_ref, x3_ref, o_ref):
    # params_ref: (5,) f32 in SMEM: [w_up0, w_up1, w_up2, w_down, b_down]
    # x*_ref, o_ref: (tile_rows, 128) f32 in VMEM
    w0 = params_ref[0]
    w1 = params_ref[1]
    w2 = params_ref[2]
    w_down = params_ref[3]
    b_down = params_ref[4]

    # linear_y_up (K=3, no bias) as elementwise VPU math.
    y = x1_ref[...] * w0 + x2_ref[...] * w1 + x3_ref[...] * w2
    # sigmoid -> EUP (separate VLIW slot, free under the HBM-bound roofline).
    y = jax.nn.sigmoid(y)
    # linear_y_down: 1x1 linear with bias.
    o_ref[...] = y * w_down + b_down


def net_y_forward(x1, x2, x3, w_up, w_down, b_down):
    """x1, x2, x3: (B, 1) float32. Returns (B, 1) float32.

    w_up:   (1, 3) weight of nn.Linear(3, 1, bias=False)
    w_down: (1, 1) weight of nn.Linear(1, 1)
    b_down: (1,) or (1, 1) bias of nn.Linear(1, 1)
    """
    B = x1.shape[0]

    # --- choose lane-dense tiling -------------------------------------------
    rows_needed = -(-B // _LANES)                       # ceil(B / 128)
    if rows_needed >= _MAX_TILE_ROWS:
        tile_rows = _MAX_TILE_ROWS
    else:
        tile_rows = max(8, -(-rows_needed // 8) * 8)    # multiple of 8 sublanes
    rows = -(-rows_needed // tile_rows) * tile_rows     # multiple of tile_rows
    padded = rows * _LANES
    grid = (rows // tile_rows,)

    def _prep(x):
        x = x.reshape(-1).astype(jnp.float32)
        x = jnp.pad(x, (0, padded - B))
        return x.reshape(rows, _LANES)

    x1p, x2p, x3p = _prep(x1), _prep(x2), _prep(x3)

    # All 5 scalar parameters packed into one SMEM-prefetched vector.
    params = jnp.concatenate(
        [w_up.reshape(-1), w_down.reshape(-1), b_down.reshape(-1)]
    ).astype(jnp.float32)                               # (5,)

    data_spec = pl.BlockSpec((tile_rows, _LANES), lambda i, p: (i, 0))

    out = pl.pallas_call(
        _net_y_kernel,
        out_shape=jax.ShapeDtypeStruct((rows, _LANES), jnp.float32),
        grid_spec=pltpu.PrefetchScalarGridSpec(
            num_scalar_prefetch=1,     # params -> SMEM, passed to index_maps
            grid=grid,
            in_specs=[data_spec, data_spec, data_spec],
            out_specs=pl.BlockSpec((tile_rows, _LANES), lambda i, p: (i, 0)),
        ),
        compiler_params=pltpu.CompilerParams(
            # Independent row tiles: shard across TensorCores on v7x.
            dimension_semantics=("parallel",)),
    )(params, x1p, x2p, x3p)

    # Trim the zero-padded tail and restore (B, 1).
    return out.reshape(-1)[:B].reshape(B, 1)


if __name__ == "__main__":
    key = jax.random.PRNGKey(0)
    k1, k2, k3, kw_up, kw_down, kb_down = jax.random.split(key, 6)

    B = 8
    x1 = jax.random.normal(k1, (B, 1), dtype=jnp.float32)
    x2 = jax.random.normal(k2, (B, 1), dtype=jnp.float32)
    x3 = jax.random.normal(k3, (B, 1), dtype=jnp.float32)

    # Deterministic parameter init (shapes from nn.Linear(3,1) / nn.Linear(1,1)).
    w_up = jax.random.normal(kw_up, (1, 3), dtype=jnp.float32) * 0.5
    w_down = jax.random.normal(kw_down, (1, 1), dtype=jnp.float32) * 0.5
    b_down = jax.random.normal(kb_down, (1, 1), dtype=jnp.float32) * 0.1

    out = net_y_forward(x1, x2, x3, w_up, w_down, b_down)
    out = jax.block_until_ready(out)

    # Pure-JAX reference of the same math.
    x = jnp.concatenate([x1, x2, x3], axis=1)
    ref = jax.nn.sigmoid(x @ w_up.T) * w_down[0, 0] + b_down[0, 0]
    assert out.shape == (B, 1)
    assert jnp.allclose(out, ref, atol=1e-5, rtol=1e-5)

    print("KERNEL_OK")
</pallas_src>

<mosaic_0001>
module attributes {stable_mosaic.version = 11 : i64} {
  func.func @_net_y_kernel(%arg0: i32, %arg1: memref<5xf32, #tpu.memory_space<smem>>, %arg2: memref<8x128xf32, #tpu.memory_space<vmem>>, %arg3: memref<8x128xf32, #tpu.memory_space<vmem>>, %arg4: memref<8x128xf32, #tpu.memory_space<vmem>>, %arg5: memref<8x128xf32, #tpu.memory_space<vmem>>) attributes {dimension_semantics = [#tpu.dimension_semantics<parallel>], iteration_bounds = array<i64: 1>, scalar_prefetch = 1 : i64, scratch_operands = 0 : i64, tpu.core_type = #tpu.core_type<tc>, window_params = [{transform_indices = @transform_0, window_bounds = array<i64: 8, 128>}, {transform_indices = @transform_1, window_bounds = array<i64: 8, 128>}, {transform_indices = @transform_2, window_bounds = array<i64: 8, 128>}, {transform_indices = @transform_3, window_bounds = array<i64: 8, 128>}]} {
    %c0 = arith.constant 0 : index
    %0 = memref.load %arg1[%c0] : memref<5xf32, #tpu.memory_space<smem>>
    %c1 = arith.constant 1 : index
    %1 = memref.load %arg1[%c1] : memref<5xf32, #tpu.memory_space<smem>>
    %c2 = arith.constant 2 : index
    %2 = memref.load %arg1[%c2] : memref<5xf32, #tpu.memory_space<smem>>
    %c3 = arith.constant 3 : index
    %3 = memref.load %arg1[%c3] : memref<5xf32, #tpu.memory_space<smem>>
    %c4 = arith.constant 4 : index
    %4 = memref.load %arg1[%c4] : memref<5xf32, #tpu.memory_space<smem>>
    %c0_0 = arith.constant 0 : index
    %c0_1 = arith.constant 0 : index
    %5 = vector.load %arg2[%c0_0, %c0_1] : memref<8x128xf32, #tpu.memory_space<vmem>>, vector<8x128xf32>
    %6 = vector.broadcast %0 : f32 to vector<8x128xf32>
    %7 = arith.mulf %5, %6 : vector<8x128xf32>
    %c0_2 = arith.constant 0 : index
    %c0_3 = arith.constant 0 : index
    %8 = vector.load %arg3[%c0_2, %c0_3] : memref<8x128xf32, #tpu.memory_space<vmem>>, vector<8x128xf32>
    %9 = vector.broadcast %1 : f32 to vector<8x128xf32>
    %10 = arith.mulf %8, %9 : vector<8x128xf32>
    %11 = arith.addf %7, %10 : vector<8x128xf32>
    %c0_4 = arith.constant 0 : index
    %c0_5 = arith.constant 0 : index
    %12 = vector.load %arg4[%c0_4, %c0_5] : memref<8x128xf32, #tpu.memory_space<vmem>>, vector<8x128xf32>
    %13 = vector.broadcast %2 : f32 to vector<8x128xf32>
    %14 = arith.mulf %12, %13 : vector<8x128xf32>
    %15 = arith.addf %11, %14 : vector<8x128xf32>
    %16 = arith.negf %15 : vector<8x128xf32>
    %17 = math.exp %16 : vector<8x128xf32>
    %cst = arith.constant 1.000000e+00 : f32
    %18 = vector.broadcast %cst : f32 to vector<8x128xf32>
    %19 = arith.addf %18, %17 : vector<8x128xf32>
    %20 = arith.divf %18, %19 : vector<8x128xf32>
    %21 = vector.broadcast %3 : f32 to vector<8x128xf32>
    %22 = arith.mulf %20, %21 : vector<8x128xf32>
    %23 = vector.broadcast %4 : f32 to vector<8x128xf32>
    %24 = arith.addf %22, %23 : vector<8x128xf32>
    %c0_6 = arith.constant 0 : index
    %c0_7 = arith.constant 0 : index
    %25 = vector.load %arg5[%c0_6, %c0_7] : memref<8x128xf32, #tpu.memory_space<vmem>>, vector<8x128xf32>
    tpu.vector_store %arg5[%c0_6, %c0_7], %24 {strides = array<i32>} : memref<8x128xf32, #tpu.memory_space<vmem>>, vector<8x128xf32>,
    return
  }
  func.func @transform_0(%arg0: i32, %arg1: memref<5xf32, #tpu.memory_space<smem>>) -> (i32, i32) {
    %c0_i32 = arith.constant 0 : i32
    %c0_i32_0 = arith.constant 0 : i32
    return %arg0, %c0_i32 : i32, i32
  }
  func.func @transform_1(%arg0: i32, %arg1: memref<5xf32, #tpu.memory_space<smem>>) -> (i32, i32) {
    %c0_i32 = arith.constant 0 : i32
    %c0_i32_0 = arith.constant 0 : i32
    return %arg0, %c0_i32 : i32, i32
  }
  func.func @transform_2(%arg0: i32, %arg1: memref<5xf32, #tpu.memory_space<smem>>) -> (i32, i32) {
    %c0_i32 = arith.constant 0 : i32
    %c0_i32_0 = arith.constant 0 : i32
    return %arg0, %c0_i32 : i32, i32
  }
  func.func @transform_3(%arg0: i32, %arg1: memref<5xf32, #tpu.memory_space<smem>>) -> (i32, i32) {
    %c0_i32 = arith.constant 0 : i32
    %c0_i32_0 = arith.constant 0 : i32
    return %arg0, %c0_i32 : i32, i32
  }
}

</mosaic_0001>

<llo_original>
// kernel: tpu_custom_call.1
$region0: #{tpu_custom_call.1}
  #allocation0 [shape = 'u32[]', space=smem, size = 0x4, offset = 0x4, fixed_abs, tag = 'smem constant byte address 0x4 - core index']
  #allocation1 [shape = 'u32[144,128]{1,0:T(1,128)}', space=vmem, size = 0x12000, scoped, tag = 'internal scratch']
  #allocation2 [shape = 's32[1]{0}', space=sflag, size = 0x4, scoped, tag = 'scoped memory for tpu_custom_call.1']
  #allocation3 [shape = 'u8[512]{0}', space=smem, size = 0x200, scoped, tag = 'prefetched SMEM operand 0']
  %s0 = inlined_call_operand.hbm [shape: f32[5], index: 0, kind: input, shape index: {}]
  %s1 = inlined_call_operand.hbm [shape: f32[8,128], index: 1, kind: input, shape index: {}]
  %s2 = inlined_call_operand.hbm [shape: f32[8,128], index: 2, kind: input, shape index: {}]
  %s3 = inlined_call_operand.vmem [shape: f32[8,128], index: 3, kind: input, shape index: {}]
  %s4 = inlined_call_operand.hbm [shape: f32[8,128], index: 4, kind: output, shape index: {}]
  %s5 = sld [smem:[#allocation0]]
  $region30: #{tpu_custom_call.1} parent=0
    _
  %s7 = ssub.s32 1, %s5
  %s8 = scalar_select 0, %s7, %s5
  %10 = dma.hbm_to_smem %s0, 16, [#allocation3], [#allocation2]
  %11 = dma.done [#allocation2], 16
  %12 = sfence
  $region1: #{tpu_custom_call.1} parent=0
    #allocation4 [shape = 'u8[4096]{0}', space=vmem, size = 0x1000, scoped, tag = 'input window, operand 1, single buffered']
    #allocation5 [shape = 's32[1]{0}', space=sflag, size = 0x4, scoped, tag = 'scoped memory for tpu_custom_call.1']
    #allocation6 [shape = 's32[1]{0}', space=sflag, size = 0x4, scoped, tag = 'scoped memory for tpu_custom_call.1']
    #allocation7 [shape = 'u8[4096]{0}', space=vmem, size = 0x1000, scoped, tag = 'input window, operand 2, single buffered']
    #allocation8 [shape = 's32[1]{0}', space=sflag, size = 0x4, scoped, tag = 'scoped memory for tpu_custom_call.1']
    #allocation9 [shape = 'u8[4096]{0}', space=vmem, size = 0x1000, scoped, tag = 'output window, operand 0, single buffered']
    %13 = vsyncpa [#allocation5], 0
    %14 = vsyncpa [#allocation8], 0
    %15 = vsyncpa [#allocation6], 0
    // Predicated region
    $region2: #{tpu_custom_call.1} parent=1 // pred_check
      _
    $region3: #{tpu_custom_call.1} parent=1 // pred_check_branch
      %17 = sbr.rel (0) target = $region5
    $region4: #{tpu_custom_call.1} parent=1 // pred_region
      %s19 = ssub.s32 128, 128
      %20 = vsyncadd [#allocation5], %s19
      %s22 = sshll.u32 [#allocation4], 4
      %s23 = int_to_ptr.vmem [resolvable:$true] %s22
      %25 = dma.hbm_to_vmem [thread:$0]  %s1, 128, %s23, [#allocation5]
    $region5: #{tpu_custom_call.1} parent=1 // pred_fallthru
      _
    // Predicated region
    $region6: #{tpu_custom_call.1} parent=1 // pred_check
      _
    $region7: #{tpu_custom_call.1} parent=1 // pred_check_branch
      %27 = sbr.rel (0) target = $region9
    $region8: #{tpu_custom_call.1} parent=1 // pred_region
      %s29 = ssub.s32 128, 128
      %30 = vsyncadd [#allocation8], %s29
      %s32 = sshll.u32 [#allocation7], 4
      %s33 = int_to_ptr.vmem [resolvable:$true] %s32
      %35 = dma.hbm_to_vmem [thread:$0]  %s2, 128, %s33, [#allocation8]
    $region9: #{tpu_custom_call.1} parent=1 // pred_fallthru
      _
    // Predicated region
    $region10: #{tpu_custom_call.1} parent=1 // pred_check
      _
    $region11: #{tpu_custom_call.1} parent=1 // pred_check_branch
      %37 = sbr.rel (0) target = $region13
    $region12: #{tpu_custom_call.1} parent=1 // pred_region
      _
    $region13: #{tpu_custom_call.1} parent=1 // pred_fallthru
      _
    // Predicated region
    $region14: #{tpu_custom_call.1} parent=1 // pred_check
      _
    $region15: #{tpu_custom_call.1} parent=1 // pred_check_branch
      %39 = sbr.rel (0) target = $region17
    $region16: #{tpu_custom_call.1} parent=1 // pred_region
      %40 = dma.done [#allocation5], 128
    $region17: #{tpu_custom_call.1} parent=1 // pred_fallthru
      _
    // Predicated region
    $region18: #{tpu_custom_call.1} parent=1 // pred_check
      _
    $region19: #{tpu_custom_call.1} parent=1 // pred_check_branch
      %42 = sbr.rel (0) target = $region21
    $region20: #{tpu_custom_call.1} parent=1 // pred_region
      %43 = dma.done [#allocation8], 128
    $region21: #{tpu_custom_call.1} parent=1 // pred_fallthru
      _
    %s44 = sld [smem:[#allocation3]]
    %s45 = sld [smem:[#allocation3 + $0x1]]
    %s46 = sld [smem:[#allocation3 + $0x2]]
    %s47 = sld [smem:[#allocation3 + $0x3]]
    %s48 = sld [smem:[#allocation3 + $0x4]]
    %v49 = vld [vmem:[#allocation4] sm:$0xff]
    %v50 = vstv %s44
    %v51 = vmul.f32 %v49, %v50
    %v52 = vld [vmem:[#allocation7] sm:$0xff]
    %v53 = vstv %s45
    %v54 = vmul.f32 %v52, %v53
    %v55 = vadd.f32 %v51, %v54
    %v56 = vld [vmem:[%s3] sm:$0xff]
    %v57 = vstv %s46
    %v58 = vmul.f32 %v56, %v57
    %v59 = vadd.f32 %v55, %v58
    %v60 = vxor.u32 %v59, 2147483648
    %v61 = vmul.f32 %v60, 1.442695
    %v62 = vpow.pop %v61
    %v63 = vadd.f32 %v62, 1.0
    %v64 = vrcp.pop %v63
    %v65 = vmul.f32 1.0, %v64
    %v66 = vstv %s47
    %v67 = vmul.f32 %v65, %v66
    %v68 = vstv %s48
    %v69 = vadd.f32 %v67, %v68
    %70 = vst [vmem:[#allocation9] sm:$0xff] %v69
    // Predicated region
    $region22: #{tpu_custom_call.1} parent=1 // pred_check
      _
    $region23: #{tpu_custom_call.1} parent=1 // pred_check_branch
      %72 = sbr.rel (0) target = $region25
    $region24: #{tpu_custom_call.1} parent=1 // pred_region
      %s74 = ssub.s32 128, 128
      %75 = vsyncadd [#allocation6], %s74
      %s77 = sshll.u32 [#allocation9], 4
      %s78 = int_to_ptr.vmem [resolvable:$true] %s77
      %80 = dma.vmem_to_hbm [thread:$0]  %s78, 128, %s4, [#allocation6]
    $region25: #{tpu_custom_call.1} parent=1 // pred_fallthru
      _
    // Predicated region
    $region26: #{tpu_custom_call.1} parent=1 // pred_check
      _
    $region27: #{tpu_custom_call.1} parent=1 // pred_check_branch
      %82 = sbr.rel (0) target = $region29
    $region28: #{tpu_custom_call.1} parent=1 // pred_region
      %83 = dma.done [#allocation6], 128
    $region29: #{tpu_custom_call.1} parent=1 // pred_fallthru
      _
    %84 = vsyncpa [#allocation5], 1
    %85 = vsyncpa [#allocation8], 1
    %86 = vsyncpa [#allocation6], 1

</llo_original>
